<compile_context>
chip_gen: v7x
topology: tpu7x:2x2x1
jax: 0.10.0
libtpu: 0.0.40
codegen_flags: <defaults>
</compile_context>

<pallas_src>
import jax
import jax.numpy as jnp
from jax import lax
from jax.experimental import pallas as pl
from jax.experimental.pallas import tpu as pltpu


# ---------------------------------------------------------------------------
# Fused kernel builder
# ---------------------------------------------------------------------------
def _build_fused_call(B, HW, nine_c, cmid, hidden, psize):
    inv_hw = 1.0 / float(HW)

    def kernel(pt_ref, wt_ref, bt_ref, w1t_ref, b1t_ref, gt_ref, bet_ref,
               w2t_ref, b2t_ref, projt_ref, rept_ref):
        b = pl.program_id(0)

        # ---- backbone: 3x3 conv as matmul, lane-dense [Cmid, H*W] tile ----
        acc_t = jnp.dot(wt_ref[...], pt_ref[...],
                        preferred_element_type=jnp.float32)        # [Cmid, HW]
        acc_t = jnp.maximum(acc_t + bt_ref[...], 0.0)              # bias + ReLU
        # AdaptiveAvgPool2d(1) + Flatten -> one column of rep_t
        pooled = jnp.sum(acc_t, axis=-1, keepdims=True) * inv_hw   # [Cmid, 1]

        @pl.when(b == 0)
        def _init():
            rept_ref[...] = jnp.zeros_like(rept_ref)

        # scatter this image's pooled features into column b of the resident
        # rep_t accumulator (select-write; O(B*Cmid) per step, negligible here)
        lane = lax.broadcasted_iota(jnp.int32, (cmid, B), 1)
        rept_ref[...] = jnp.where(lane == b, pooled, rept_ref[...])

        # ---- projector MLP, fused at the last grid step --------------------
        @pl.when(b == pl.num_programs(0) - 1)
        def _proj():
            rep_t = rept_ref[...]                                   # [Cmid, B]
            h_t = jnp.dot(w1t_ref[...], rep_t,
                          preferred_element_type=jnp.float32) + b1t_ref[...]
            # BatchNorm1d training mode: batch mean / biased batch variance
            mean = jnp.mean(h_t, axis=1, keepdims=True)
            var = jnp.mean((h_t - mean) ** 2, axis=1, keepdims=True)
            hn_t = (h_t - mean) * lax.rsqrt(var + 1e-5) * gt_ref[...] + bet_ref[...]
            hn_t = jnp.maximum(hn_t, 0.0)                           # ReLU
            projt_ref[...] = jnp.dot(w2t_ref[...], hn_t,
                                     preferred_element_type=jnp.float32) + b2t_ref[...]

    def full(*s):  # whole-array block, constant index -> resident across grid
        return pl.BlockSpec(s, lambda b: (0,) * len(s))

    return pl.pallas_call(
        kernel,
        out_shape=(jax.ShapeDtypeStruct((psize, B), jnp.float32),   # proj^T
                   jax.ShapeDtypeStruct((cmid, B), jnp.float32)),   # rep^T
        grid_spec=pltpu.PrefetchScalarGridSpec(
            num_scalar_prefetch=0,
            grid=(B,),
            in_specs=[
                # per-image im2col patches, transposed: [9*Cin, H*W]
                pl.BlockSpec((None, nine_c, HW), lambda b: (b, 0, 0)),
                full(cmid, nine_c),    # conv weight (flattened, transposed)
                full(cmid, 1),         # conv bias
                full(hidden, cmid),    # w1^T
                full(hidden, 1),       # b1
                full(hidden, 1),       # gamma
                full(hidden, 1),       # beta
                full(psize, hidden),   # w2^T
                full(psize, 1),        # b2
            ],
            out_specs=[full(psize, B), full(cmid, B)],
        ),
        # Sequential batch grid: rep_t / proj_t are cross-step accumulators and
        # the fused BatchNorm needs every batch row at the final step.
        compiler_params=pltpu.CompilerParams(
            dimension_semantics=("arbitrary",)),
    )


# ---------------------------------------------------------------------------
# Glue: im2col patch extraction in transposed layout (runs under jit / XLA)
# ---------------------------------------------------------------------------
def _im2col_3x3_t(x_nhwc):
    """[B,H,W,C] -> [B, 9*C, H*W] with the 9*C axis ordered (kh, kw, cin)."""
    B, H, W, C = x_nhwc.shape
    xp = jnp.pad(x_nhwc, ((0, 0), (1, 1), (1, 1), (0, 0)))
    cols = [xp[:, kh:kh + H, kw:kw + W, :] for kh in range(3) for kw in range(3)]
    patches = jnp.concatenate(cols, axis=-1)                 # [B, H, W, 9*C]
    return jnp.transpose(patches, (0, 3, 1, 2)).reshape(B, 9 * C, H * W)
    # TODO(synk): for large B*H*W, replace im2col (9x data inflation) with
    # in-kernel accumulation of 9 shifted [Cin]-wide matmuls to cut HBM reads.


@jax.jit
def _forward(params, x_nchw):
    x = jnp.transpose(x_nchw, (0, 2, 3, 1)).astype(jnp.float32)  # NCHW -> NHWC
    B, H, W, C = x.shape
    patches_t = _im2col_3x3_t(x)                                 # [B, 9C, H*W]
    call = _build_fused_call(B, H * W, 9 * C,
                             params['wt'].shape[0],
                             params['w1t'].shape[0],
                             params['w2t'].shape[0])
    proj_t, rep_t = call(patches_t, params['wt'], params['bt'],
                         params['w1t'], params['b1t'], params['gamma_t'],
                         params['beta_t'], params['w2t'], params['b2t'])
    return proj_t.T, rep_t.T   # lane-dense kernel outputs -> [B, ...] (XLA glue)


class NetWrapperPallas:
    """JAX/Pallas equivalent of NetWrapper(net, projection_size=16,
    projection_hidden_size=32, layer=-2, use_simsiam_mlp=False)."""

    def __init__(self, key, in_ch=4, mid_ch=8,
                 projection_size=16, projection_hidden_size=32):
        ks = jax.random.split(key, 6)
        self.mid_ch = mid_ch
        # backbone conv (HWIO layout)
        self.conv_w = 0.1 * jax.random.normal(ks[0], (3, 3, in_ch, mid_ch), jnp.float32)
        self.conv_b = 0.1 * jax.random.normal(ks[1], (mid_ch,), jnp.float32)
        # NOTE: the backbone's final Linear(8, 10) output is discarded by the
        # forward-hook mechanism (layer=-2), so its params are omitted here.
        # projector MLP(dim=mid_ch, projection_size, projection_hidden_size)
        self.w1 = 0.1 * jax.random.normal(ks[2], (mid_ch, projection_hidden_size), jnp.float32)
        self.b1 = 0.1 * jax.random.normal(ks[3], (projection_hidden_size,), jnp.float32)
        self.gamma = jnp.ones((projection_hidden_size,), jnp.float32)   # BN affine init
        self.beta = jnp.zeros((projection_hidden_size,), jnp.float32)
        self.w2 = 0.1 * jax.random.normal(ks[4], (projection_hidden_size, projection_size), jnp.float32)
        self.b2 = 0.1 * jax.random.normal(ks[5], (projection_size,), jnp.float32)
        # Pre-transposed / pre-flattened kernel parameter layouts (hoisted out
        # of the per-call path).
        self.params = dict(
            wt=self.conv_w.reshape(9 * in_ch, mid_ch).T,   # [Cmid, 9*Cin]
            bt=self.conv_b.reshape(mid_ch, 1),
            w1t=self.w1.T,                                 # [hidden, Cmid]
            b1t=self.b1.reshape(-1, 1),
            gamma_t=self.gamma.reshape(-1, 1),
            beta_t=self.beta.reshape(-1, 1),
            w2t=self.w2.T,                                 # [psize, hidden]
            b2t=self.b2.reshape(-1, 1),
        )

    def __call__(self, x_nchw, return_projection=True):
        proj, rep = _forward(self.params, x_nchw)
        if not return_projection:
            return rep
        return proj, rep
        # TODO(synk): the forward-hook / singleton-projector bookkeeping of the
        # PyTorch class is Python control flow with no kernel equivalent.


# ---------------------------------------------------------------------------
# Pure-JAX reference for correctness verification
# ---------------------------------------------------------------------------
def _reference(x_nchw, m: NetWrapperPallas):
    x = jnp.transpose(x_nchw, (0, 2, 3, 1)).astype(jnp.float32)
    y = lax.conv_general_dilated(x, m.conv_w, (1, 1), 'SAME',
                                 dimension_numbers=('NHWC', 'HWIO', 'NHWC'))
    y = jnp.maximum(y + m.conv_b, 0.0)
    rep = jnp.mean(y, axis=(1, 2))
    h = rep @ m.w1 + m.b1
    mean = h.mean(0)
    var = ((h - mean) ** 2).mean(0)
    hn = (h - mean) / jnp.sqrt(var + 1e-5) * m.gamma + m.beta
    hn = jnp.maximum(hn, 0.0)
    proj = hn @ m.w2 + m.b2
    return proj, rep


if __name__ == "__main__":
    key = jax.random.PRNGKey(0)
    pkey, xkey = jax.random.split(key)
    model = NetWrapperPallas(pkey)

    # PyTorch-style NCHW input: batch=2, channels=4, spatial=16x16
    x = jax.random.normal(xkey, (2, 4, 16, 16), jnp.float32)

    proj, rep = model(x, return_projection=True)
    jax.block_until_ready((proj, rep))

    ref_proj, ref_rep = _reference(x, model)
    assert proj.shape == (2, 16) and rep.shape == (2, 8)
    assert jnp.allclose(rep, ref_rep, atol=1e-4, rtol=1e-4)
    assert jnp.allclose(proj, ref_proj, atol=1e-4, rtol=1e-4)
    print("KERNEL_OK")
</pallas_src>

<mosaic_0001>
module attributes {stable_mosaic.version = 11 : i64} {
  func.func @kernel(%arg0: i32, %arg1: memref<1x36x256xf32, #tpu.memory_space<vmem>>, %arg2: memref<8x36xf32, #tpu.memory_space<vmem>>, %arg3: memref<8x1xf32, #tpu.memory_space<vmem>>, %arg4: memref<32x8xf32, #tpu.memory_space<vmem>>, %arg5: memref<32x1xf32, #tpu.memory_space<vmem>>, %arg6: memref<32x1xf32, #tpu.memory_space<vmem>>, %arg7: memref<32x1xf32, #tpu.memory_space<vmem>>, %arg8: memref<16x32xf32, #tpu.memory_space<vmem>>, %arg9: memref<16x1xf32, #tpu.memory_space<vmem>>, %arg10: memref<16x2xf32, #tpu.memory_space<vmem>>, %arg11: memref<8x2xf32, #tpu.memory_space<vmem>>) attributes {dimension_semantics = [#tpu.dimension_semantics<arbitrary>], iteration_bounds = array<i64: 2>, scalar_prefetch = 0 : i64, scratch_operands = 0 : i64, tpu.core_type = #tpu.core_type<tc>, window_params = [{transform_indices = @transform_0, window_bounds = array<i64: 1, 36, 256>}, {pipeline_mode = #tpu.pipeline_mode<synchronous>, transform_indices = @transform_1, window_bounds = array<i64: 8, 36>}, {pipeline_mode = #tpu.pipeline_mode<synchronous>, transform_indices = @transform_2, window_bounds = array<i64: 8, 1>}, {pipeline_mode = #tpu.pipeline_mode<synchronous>, transform_indices = @transform_3, window_bounds = array<i64: 32, 8>}, {pipeline_mode = #tpu.pipeline_mode<synchronous>, transform_indices = @transform_4, window_bounds = array<i64: 32, 1>}, {pipeline_mode = #tpu.pipeline_mode<synchronous>, transform_indices = @transform_5, window_bounds = array<i64: 32, 1>}, {pipeline_mode = #tpu.pipeline_mode<synchronous>, transform_indices = @transform_6, window_bounds = array<i64: 32, 1>}, {pipeline_mode = #tpu.pipeline_mode<synchronous>, transform_indices = @transform_7, window_bounds = array<i64: 16, 32>}, {pipeline_mode = #tpu.pipeline_mode<synchronous>, transform_indices = @transform_8, window_bounds = array<i64: 16, 1>}, {pipeline_mode = #tpu.pipeline_mode<synchronous>, transform_indices = @transform_9, window_bounds = array<i64: 16, 2>}, {pipeline_mode = #tpu.pipeline_mode<synchronous>, transform_indices = @transform_10, window_bounds = array<i64: 8, 2>}]} {
    %c0 = arith.constant 0 : index
    %c0_0 = arith.constant 0 : index
    %0 = vector.load %arg2[%c0, %c0_0] : memref<8x36xf32, #tpu.memory_space<vmem>>, vector<8x36xf32>
    %c0_1 = arith.constant 0 : index
    %c0_2 = arith.constant 0 : index
    %c0_3 = arith.constant 0 : index
    %1 = vector.load %arg1[%c0_1, %c0_2, %c0_3] : memref<1x36x256xf32, #tpu.memory_space<vmem>>, vector<1x36x256xf32>
    %2 = vector.shape_cast %1 : vector<1x36x256xf32> to vector<36x256xf32>
    %cst = arith.constant dense<0.000000e+00> : vector<8x256xf32>
    %3 = tpu.matmul %0, %2, %cst {dimension_numbers = #tpu.dot_dimension_numbers<[1], [0], [0], [1], [0, 0, 1, 1], [], []>} : vector<8x36xf32>, vector<36x256xf32>, vector<8x256xf32> -> vector<8x256xf32>
    %c0_4 = arith.constant 0 : index
    %c0_5 = arith.constant 0 : index
    %4 = vector.load %arg3[%c0_4, %c0_5] : memref<8x1xf32, #tpu.memory_space<vmem>>, vector<8x1xf32>
    %5 = vector.broadcast %4 : vector<8x1xf32> to vector<8x256xf32>
    %6 = arith.addf %3, %5 : vector<8x256xf32>
    %cst_6 = arith.constant 0.000000e+00 : f32
    %7 = vector.broadcast %cst_6 : f32 to vector<8x256xf32>
    %8 = arith.maximumf %6, %7 : vector<8x256xf32>
    %cst_7 = arith.constant dense<0.000000e+00> : vector<8xf32>
    %9 = vector.multi_reduction <add>, %8, %cst_7 [1] : vector<8x256xf32> to vector<8xf32>
    %10 = vector.shape_cast %9 : vector<8xf32> to vector<8x1xf32>
    %cst_8 = arith.constant 3.906250e-03 : f32
    %11 = vector.broadcast %cst_8 : f32 to vector<8x1xf32>
    %12 = arith.mulf %10, %11 : vector<8x1xf32>
    %c0_i32 = arith.constant 0 : i32
    %13 = arith.cmpi eq, %arg0, %c0_i32 : i32
    %14 = arith.extui %13 : i1 to i32
    %c0_i32_9 = arith.constant 0 : i32
    %15 = arith.cmpi ne, %14, %c0_i32_9 : i32
    scf.if %15 {
      %cst_15 = arith.constant 0.000000e+00 : f32
      %27 = vector.broadcast %cst_15 : f32 to vector<8x2xf32>
      %c0_16 = arith.constant 0 : index
      %c0_17 = arith.constant 0 : index
      %28 = vector.load %arg11[%c0_16, %c0_17] : memref<8x2xf32, #tpu.memory_space<vmem>>, vector<8x2xf32>
      tpu.vector_store %arg11[%c0_16, %c0_17], %27 {strides = array<i32>} : memref<8x2xf32, #tpu.memory_space<vmem>>, vector<8x2xf32>,
    } else {
    }
    %16 = tpu.iota {dimensions = array<i32: 1>} : vector<8x2xi32>
    %17 = vector.broadcast %arg0 : i32 to vector<8x2xi32>
    %18 = arith.cmpi eq, %16, %17 : vector<8x2xi32>
    %c0_10 = arith.constant 0 : index
    %c0_11 = arith.constant 0 : index
    %19 = vector.load %arg11[%c0_10, %c0_11] : memref<8x2xf32, #tpu.memory_space<vmem>>, vector<8x2xf32>
    %20 = vector.shape_cast %12 : vector<8x1xf32> to vector<8x1xf32>
    %21 = vector.broadcast %20 : vector<8x1xf32> to vector<8x2xf32>
    %22 = arith.select %18, %21, %19 : vector<8x2xi1>, vector<8x2xf32>
    %c0_12 = arith.constant 0 : index
    %c0_13 = arith.constant 0 : index
    %23 = vector.load %arg11[%c0_12, %c0_13] : memref<8x2xf32, #tpu.memory_space<vmem>>, vector<8x2xf32>
    tpu.vector_store %arg11[%c0_12, %c0_13], %22 {strides = array<i32>} : memref<8x2xf32, #tpu.memory_space<vmem>>, vector<8x2xf32>,
    %c1_i32 = arith.constant 1 : i32
    %24 = arith.cmpi eq, %arg0, %c1_i32 : i32
    %25 = arith.extui %24 : i1 to i32
    %c0_i32_14 = arith.constant 0 : i32
    %26 = arith.cmpi ne, %25, %c0_i32_14 : i32
    scf.if %26 {
      %c0_15 = arith.constant 0 : index
      %c0_16 = arith.constant 0 : index
      %27 = vector.load %arg11[%c0_15, %c0_16] : memref<8x2xf32, #tpu.memory_space<vmem>>, vector<8x2xf32>
      %c0_17 = arith.constant 0 : index
      %c0_18 = arith.constant 0 : index
      %28 = vector.load %arg4[%c0_17, %c0_18] : memref<32x8xf32, #tpu.memory_space<vmem>>, vector<32x8xf32>
      %cst_19 = arith.constant dense<0.000000e+00> : vector<32x2xf32>
      %29 = tpu.matmul %28, %27, %cst_19 {dimension_numbers = #tpu.dot_dimension_numbers<[1], [0], [0], [1], [0, 0, 1, 1], [], []>} : vector<32x8xf32>, vector<8x2xf32>, vector<32x2xf32> -> vector<32x2xf32>
      %c0_20 = arith.constant 0 : index
      %c0_21 = arith.constant 0 : index
      %30 = vector.load %arg5[%c0_20, %c0_21] : memref<32x1xf32, #tpu.memory_space<vmem>>, vector<32x1xf32>
      %31 = vector.broadcast %30 : vector<32x1xf32> to vector<32x2xf32>
      %32 = arith.addf %29, %31 : vector<32x2xf32>
      %cst_22 = arith.constant dense<0.000000e+00> : vector<32xf32>
      %33 = vector.multi_reduction <add>, %32, %cst_22 [1] : vector<32x2xf32> to vector<32xf32>
      %34 = vector.shape_cast %33 : vector<32xf32> to vector<32x1xf32>
      %cst_23 = arith.constant 2.000000e+00 : f32
      %35 = vector.broadcast %cst_23 : f32 to vector<32x1xf32>
      %36 = arith.divf %34, %35 : vector<32x1xf32>
      %37 = vector.broadcast %36 : vector<32x1xf32> to vector<32x2xf32>
      %38 = arith.subf %32, %37 : vector<32x2xf32>
      %39 = arith.mulf %38, %38 : vector<32x2xf32>
      %cst_24 = arith.constant dense<0.000000e+00> : vector<32xf32>
      %40 = vector.multi_reduction <add>, %39, %cst_24 [1] : vector<32x2xf32> to vector<32xf32>
      %41 = vector.shape_cast %40 : vector<32xf32> to vector<32x1xf32>
      %cst_25 = arith.constant 2.000000e+00 : f32
      %42 = vector.broadcast %cst_25 : f32 to vector<32x1xf32>
      %43 = arith.divf %41, %42 : vector<32x1xf32>
      %44 = vector.broadcast %36 : vector<32x1xf32> to vector<32x2xf32>
      %45 = arith.subf %32, %44 : vector<32x2xf32>
      %cst_26 = arith.constant 9.99999974E-6 : f32
      %46 = vector.broadcast %cst_26 : f32 to vector<32x1xf32>
      %47 = arith.addf %43, %46 : vector<32x1xf32>
      %48 = math.rsqrt %47 : vector<32x1xf32>
      %49 = vector.broadcast %48 : vector<32x1xf32> to vector<32x2xf32>
      %50 = arith.mulf %45, %49 : vector<32x2xf32>
      %c0_27 = arith.constant 0 : index
      %c0_28 = arith.constant 0 : index
      %51 = vector.load %arg6[%c0_27, %c0_28] : memref<32x1xf32, #tpu.memory_space<vmem>>, vector<32x1xf32>
      %52 = vector.broadcast %51 : vector<32x1xf32> to vector<32x2xf32>
      %53 = arith.mulf %50, %52 : vector<32x2xf32>
      %c0_29 = arith.constant 0 : index
      %c0_30 = arith.constant 0 : index
      %54 = vector.load %arg7[%c0_29, %c0_30] : memref<32x1xf32, #tpu.memory_space<vmem>>, vector<32x1xf32>
      %55 = vector.broadcast %54 : vector<32x1xf32> to vector<32x2xf32>
      %56 = arith.addf %53, %55 : vector<32x2xf32>
      %cst_31 = arith.constant 0.000000e+00 : f32
      %57 = vector.broadcast %cst_31 : f32 to vector<32x2xf32>
      %58 = arith.maximumf %56, %57 : vector<32x2xf32>
      %c0_32 = arith.constant 0 : index
      %c0_33 = arith.constant 0 : index
      %59 = vector.load %arg8[%c0_32, %c0_33] : memref<16x32xf32, #tpu.memory_space<vmem>>, vector<16x32xf32>
      %cst_34 = arith.constant dense<0.000000e+00> : vector<16x2xf32>
      %60 = tpu.matmul %59, %58, %cst_34 {dimension_numbers = #tpu.dot_dimension_numbers<[1], [0], [0], [1], [0, 0, 1, 1], [], []>} : vector<16x32xf32>, vector<32x2xf32>, vector<16x2xf32> -> vector<16x2xf32>
      %c0_35 = arith.constant 0 : index
      %c0_36 = arith.constant 0 : index
      %61 = vector.load %arg9[%c0_35, %c0_36] : memref<16x1xf32, #tpu.memory_space<vmem>>, vector<16x1xf32>
      %62 = vector.broadcast %61 : vector<16x1xf32> to vector<16x2xf32>
      %63 = arith.addf %60, %62 : vector<16x2xf32>
      %c0_37 = arith.constant 0 : index
      %c0_38 = arith.constant 0 : index
      %64 = vector.load %arg10[%c0_37, %c0_38] : memref<16x2xf32, #tpu.memory_space<vmem>>, vector<16x2xf32>
      tpu.vector_store %arg10[%c0_37, %c0_38], %63 {strides = array<i32>} : memref<16x2xf32, #tpu.memory_space<vmem>>, vector<16x2xf32>,
    } else {
    }
    return
  }
  func.func @transform_0(%arg0: i32) -> (i32, i32, i32) {
    %c0_i32 = arith.constant 0 : i32
    %c0_i32_0 = arith.constant 0 : i32
    %c0_i32_1 = arith.constant 0 : i32
    return %arg0, %c0_i32, %c0_i32_0 : i32, i32, i32
  }
  func.func @transform_1(%arg0: i32) -> (i32, i32) {
    %c0_i32 = arith.constant 0 : i32
    %c0_i32_0 = arith.constant 0 : i32
    %c0_i32_1 = arith.constant 0 : i32
    return %c0_i32, %c0_i32_0 : i32, i32
  }
  func.func @transform_2(%arg0: i32) -> (i32, i32) {
    %c0_i32 = arith.constant 0 : i32
    %c0_i32_0 = arith.constant 0 : i32
    %c0_i32_1 = arith.constant 0 : i32
    return %c0_i32, %c0_i32_0 : i32, i32
  }
  func.func @transform_3(%arg0: i32) -> (i32, i32) {
    %c0_i32 = arith.constant 0 : i32
    %c0_i32_0 = arith.constant 0 : i32
    %c0_i32_1 = arith.constant 0 : i32
    return %c0_i32, %c0_i32_0 : i32, i32
  }
  func.func @transform_4(%arg0: i32) -> (i32, i32) {
    %c0_i32 = arith.constant 0 : i32
    %c0_i32_0 = arith.constant 0 : i32
    %c0_i32_1 = arith.constant 0 : i32
    return %c0_i32, %c0_i32_0 : i32, i32
  }
  func.func @transform_5(%arg0: i32) -> (i32, i32) {
    %c0_i32 = arith.constant 0 : i32
    %c0_i32_0 = arith.constant 0 : i32
    %c0_i32_1 = arith.constant 0 : i32
    return %c0_i32, %c0_i32_0 : i32, i32
  }
  func.func @transform_6(%arg0: i32) -> (i32, i32) {
    %c0_i32 = arith.constant 0 : i32
    %c0_i32_0 = arith.constant 0 : i32
    %c0_i32_1 = arith.constant 0 : i32
    return %c0_i32, %c0_i32_0 : i32, i32
  }
  func.func @transform_7(%arg0: i32) -> (i32, i32) {
    %c0_i32 = arith.constant 0 : i32
    %c0_i32_0 = arith.constant 0 : i32
    %c0_i32_1 = arith.constant 0 : i32
    return %c0_i32, %c0_i32_0 : i32, i32
  }
  func.func @transform_8(%arg0: i32) -> (i32, i32) {
    %c0_i32 = arith.constant 0 : i32
    %c0_i32_0 = arith.constant 0 : i32
    %c0_i32_1 = arith.constant 0 : i32
    return %c0_i32, %c0_i32_0 : i32, i32
  }
  func.func @transform_9(%arg0: i32) -> (i32, i32) {
    %c0_i32 = arith.constant 0 : i32
    %c0_i32_0 = arith.constant 0 : i32
    %c0_i32_1 = arith.constant 0 : i32
    return %c0_i32, %c0_i32_0 : i32, i32
  }
  func.func @transform_10(%arg0: i32) -> (i32, i32) {
    %c0_i32 = arith.constant 0 : i32
    %c0_i32_0 = arith.constant 0 : i32
    %c0_i32_1 = arith.constant 0 : i32
    return %c0_i32, %c0_i32_0 : i32, i32
  }
}

</mosaic_0001>

<llo_original>
// kernel: _forward.1
$region0: #{_forward.1}
  #allocation0 [shape = 'u32[]', space=smem, size = 0x4, offset = 0x4, fixed_abs, tag = 'smem constant byte address 0x4 - core index']
  #allocation1 [shape = 'u32[144,128]{1,0:T(1,128)}', space=vmem, size = 0x12000, scoped, tag = 'internal scratch']
  %s0 = inlined_call_operand.vmem [shape: f32[2,36,256], index: 0, kind: input, shape index: {}]
  %s1 = inlined_call_operand.vmem [shape: f32[8,36], index: 1, kind: input, shape index: {}]
  %s2 = inlined_call_operand.vmem [shape: f32[8,1], index: 2, kind: input, shape index: {}]
  %s3 = inlined_call_operand.vmem [shape: f32[32,8], index: 3, kind: input, shape index: {}]
  %s4 = inlined_call_operand.vmem [shape: f32[32,1], index: 4, kind: input, shape index: {}]
  %s5 = inlined_call_operand.vmem [shape: f32[32,1], index: 5, kind: input, shape index: {}]
  %s6 = inlined_call_operand.vmem [shape: f32[32,1], index: 6, kind: input, shape index: {}]
  %s7 = inlined_call_operand.vmem [shape: f32[16,32], index: 7, kind: input, shape index: {}]
  %s8 = inlined_call_operand.vmem [shape: f32[16,1], index: 8, kind: input, shape index: {}]
  %s9 = inlined_call_operand.vmem [shape: f32[16,2], index: 9, kind: output, shape index: {0}]
  %s10 = inlined_call_operand.vmem [shape: f32[8,2], index: 10, kind: output, shape index: {1}]
  %11 = xla_tuple %s9, %s10
  %s12 = sld [smem:[#allocation0]]
  $region85: #{_forward.1} parent=0
    _
  %s14 = ssub.s32 1, %s12
  %s15 = scalar_select 0, %s14, %s12
  loop: start=0, step=1, limit=4
  $region2: #{_forward.1} parent=0 // loop_pre_header
    _
  $region3: #{_forward.1} parent=0 // loop_header
    %s17 = sphi 0, %s21
    %p18 = scmp.ge.s32.totalorder %s17, 4
    %s27 = sphi 0, %s29
    %s30 = sphi 0, %s27
    %s31 = sphi 0, %s30
    %s47 = sphi 0, %s31
    %s51 = sphi 0, %s51
    %s53 = sphi 0, %s51
    %s54 = sphi 0, %s53
    %s68 = sphi 0, %s54
    %s72 = sphi 0, %s72
    %s74 = sphi 0, %s72
    %s75 = sphi 0, %s74
    %s89 = sphi 0, %s75
    %s93 = sphi 0, %s93
    %s95 = sphi 0, %s93
    %s96 = sphi 0, %s95
    %s110 = sphi 0, %s96
    %s114 = sphi 0, %s114
    %s116 = sphi 0, %s114
    %s117 = sphi 0, %s116
    %s131 = sphi 0, %s117
    %s135 = sphi 0, %s135
    %s137 = sphi 0, %s135
    %s138 = sphi 0, %s137
    %s152 = sphi 0, %s138
    %s156 = sphi 0, %s156
    %s158 = sphi 0, %s156
    %s159 = sphi 0, %s158
    %s173 = sphi 0, %s159
    %s177 = sphi 0, %s177
    %s179 = sphi 0, %s177
    %s180 = sphi 0, %s179
    %s194 = sphi 0, %s180
    %s198 = sphi 0, %s198
    %s200 = sphi 0, %s198
    %s201 = sphi 0, %s200
    %s215 = sphi 0, %s201
    %s219 = sphi 0, %s219
    %s221 = sphi 0, %s219
    %s222 = sphi 0, %s221
    %s236 = sphi 0, %s222
    %s240 = sphi 0, %s240
    %s242 = sphi 0, %s240
    %s243 = sphi 0, %s242
    %s257 = sphi 0, %s243
  $region4: #{_forward.1} parent=0 // loop_header_branch
    %20 = sbr.rel (%p18) target = $region8
  $region5: #{_forward.1} parent=0 // loop_body
    %s22 = ssub.s32 %s17, 1
    %s23 = ssub.s32 %s17, 2
    %s24 = sadd.s32 %s17, 1
    %s25 = ssub.s32 %s17, %s24
    %p26 = scmp.eq.s32.totalorder %s25, 0
    %s28 = sadd.s32 %s27, 1
    %s29 = scalar_select %p26, %s27, %s28
    %p32 = pneg %p26
    %p33 = scmp.eq.s32.totalorder %s17, 1
    %p34 = por %p32, %p33
    %p35 = scmp.ne.s32.totalorder %s27, %s30
    %p36 = scmp.eq.s32.totalorder %s17, 0
    %p37 = por %p35, %p36
    %p38 = scmp.ne.s32.totalorder %s27, %s30
    %p39 = scmp.eq.s32.totalorder %s22, 1
    %p40 = por %p38, %p39
    %p41 = scmp.ne.s32.totalorder %s30, %s31
    %p42 = scmp.eq.s32.totalorder %s22, 0
    %p43 = por %p41, %p42
    %p44 = scmp.ne.s32.totalorder %s30, %s31
    %p45 = scmp.eq.s32.totalorder %s23, 1
    %p46 = por %p44, %p45
    %p48 = scmp.ne.s32.totalorder %s31, %s47
    %p49 = scmp.eq.s32.totalorder %s23, 0
    %p50 = por %p48, %p49
    %s52 = sadd.s32 %s51, 1
    %p55 = scmp.eq.s32.totalorder %s17, 1
    %p56 = scmp.ne.s32.totalorder %s51, %s53
    %p57 = scmp.eq.s32.totalorder %s17, 0
    %p58 = por %p56, %p57
    %p59 = scmp.ne.s32.totalorder %s51, %s53
    %p60 = scmp.eq.s32.totalorder %s22, 1
    %p61 = por %p59, %p60
    %p62 = scmp.ne.s32.totalorder %s53, %s54
    %p63 = scmp.eq.s32.totalorder %s22, 0
    %p64 = por %p62, %p63
    %p65 = scmp.ne.s32.totalorder %s53, %s54
    %p66 = scmp.eq.s32.totalorder %s23, 1
    %p67 = por %p65, %p66
    %p69 = scmp.ne.s32.totalorder %s54, %s68
    %p70 = scmp.eq.s32.totalorder %s23, 0
    %p71 = por %p69, %p70
    %s73 = sadd.s32 %s72, 1
    %p76 = scmp.eq.s32.totalorder %s17, 1
    %p77 = scmp.ne.s32.totalorder %s72, %s74
    %p78 = scmp.eq.s32.totalorder %s17, 0
    %p79 = por %p77, %p78
    %p80 = scmp.ne.s32.totalorder %s72, %s74
    %p81 = scmp.eq.s32.totalorder %s22, 1
    %p82 = por %p80, %p81
    %p83 = scmp.ne.s32.totalorder %s74, %s75
    %p84 = scmp.eq.s32.totalorder %s22, 0
    %p85 = por %p83, %p84
    %p86 = scmp.ne.s32.totalorder %s74, %s75
    %p87 = scmp.eq.s32.totalorder %s23, 1
    %p88 = por %p86, %p87
    %p90 = scmp.ne.s32.totalorder %s75, %s89
    %p91 = scmp.eq.s32.totalorder %s23, 0
    %p92 = por %p90, %p91
    %s94 = sadd.s32 %s93, 1
    %p97 = scmp.eq.s32.totalorder %s17, 1
    %p98 = scmp.ne.s32.totalorder %s93, %s95
    %p99 = scmp.eq.s32.totalorder %s17, 0
    %p100 = por %p98, %p99
    %p101 = scmp.ne.s32.totalorder %s93, %s95
    %p102 = scmp.eq.s32.totalorder %s22, 1
    %p103 = por %p101, %p102
    %p104 = scmp.ne.s32.totalorder %s95, %s96
    %p105 = scmp.eq.s32.totalorder %s22, 0
    %p106 = por %p104, %p105
    %p107 = scmp.ne.s32.totalorder %s95, %s96
    %p108 = scmp.eq.s32.totalorder %s23, 1
    %p109 = por %p107, %p108
    %p111 = scmp.ne.s32.totalorder %s96, %s110
    %p112 = scmp.eq.s32.totalorder %s23, 0
    %p113 = por %p111, %p112
    %s115 = sadd.s32 %s114, 1
    %p118 = scmp.eq.s32.totalorder %s17, 1
    %p119 = scmp.ne.s32.totalorder %s114, %s116
    %p120 = scmp.eq.s32.totalorder %s17, 0
    %p121 = por %p119, %p120
    %p122 = scmp.ne.s32.totalorder %s114, %s116
    %p123 = scmp.eq.s32.totalorder %s22, 1
    %p124 = por %p122, %p123
    %p125 = scmp.ne.s32.totalorder %s116, %s117
    %p126 = scmp.eq.s32.totalorder %s22, 0
    %p127 = por %p125, %p126
    %p128 = scmp.ne.s32.totalorder %s116, %s117
    %p129 = scmp.eq.s32.totalorder %s23, 1
    %p130 = por %p128, %p129
    %p132 = scmp.ne.s32.totalorder %s117, %s131
    %p133 = scmp.eq.s32.totalorder %s23, 0
    %p134 = por %p132, %p133
    %s136 = sadd.s32 %s135, 1
    %p139 = scmp.eq.s32.totalorder %s17, 1
    %p140 = scmp.ne.s32.totalorder %s135, %s137
    %p141 = scmp.eq.s32.totalorder %s17, 0
    %p142 = por %p140, %p141
    %p143 = scmp.ne.s32.totalorder %s135, %s137
    %p144 = scmp.eq.s32.totalorder %s22, 1
    %p145 = por %p143, %p144
    %p146 = scmp.ne.s32.totalorder %s137, %s138
    %p147 = scmp.eq.s32.totalorder %s22, 0
    %p148 = por %p146, %p147
    %p149 = scmp.ne.s32.totalorder %s137, %s138
    %p150 = scmp.eq.s32.totalorder %s23, 1
    %p151 = por %p149, %p150
    %p153 = scmp.ne.s32.totalorder %s138, %s152
    %p154 = scmp.eq.s32.totalorder %s23, 0
    %p155 = por %p153, %p154
    %s157 = sadd.s32 %s156, 1
    %p160 = scmp.eq.s32.totalorder %s17, 1
    %p161 = scmp.ne.s32.totalorder %s156, %s158
    %p162 = scmp.eq.s32.totalorder %s17, 0
    %p163 = por %p161, %p162
    %p164 = scmp.ne.s32.totalorder %s156, %s158
    %p165 = scmp.eq.s32.totalorder %s22, 1
    %p166 = por %p164, %p165
    %p167 = scmp.ne.s32.totalorder %s158, %s159
    %p168 = scmp.eq.s32.totalorder %s22, 0
    %p169 = por %p167, %p168
    %p170 = scmp.ne.s32.totalorder %s158, %s159
    %p171 = scmp.eq.s32.totalorder %s23, 1
    %p172 = por %p170, %p171
    %p174 = scmp.ne.s32.totalorder %s159, %s173
    %p175 = scmp.eq.s32.totalorder %s23, 0
    %p176 = por %p174, %p175
    %s178 = sadd.s32 %s177, 1
    %p181 = scmp.eq.s32.totalorder %s17, 1
    %p182 = scmp.ne.s32.totalorder %s177, %s179
    %p183 = scmp.eq.s32.totalorder %s17, 0
    %p184 = por %p182, %p183
    %p185 = scmp.ne.s32.totalorder %s177, %s179
    %p186 = scmp.eq.s32.totalorder %s22, 1
    %p187 = por %p185, %p186
    %p188 = scmp.ne.s32.totalorder %s179, %s180
    %p189 = scmp.eq.s32.totalorder %s22, 0
    %p190 = por %p188, %p189
    %p191 = scmp.ne.s32.totalorder %s179, %s180
    %p192 = scmp.eq.s32.totalorder %s23, 1
    %p193 = por %p191, %p192
    %p195 = scmp.ne.s32.totalorder %s180, %s194
    %p196 = scmp.eq.s32.totalorder %s23, 0
    %p197 = por %p195, %p196
    %s199 = sadd.s32 %s198, 1
    %p202 = scmp.eq.s32.totalorder %s17, 1
    %p203 = scmp.ne.s32.totalorder %s198, %s200
    %p204 = scmp.eq.s32.totalorder %s17, 0
    %p205 = por %p203, %p204
    %p206 = scmp.ne.s32.totalorder %s198, %s200
    %p207 = scmp.eq.s32.totalorder %s22, 1
    %p208 = por %p206, %p207
    %p209 = scmp.ne.s32.totalorder %s200, %s201
    %p210 = scmp.eq.s32.totalorder %s22, 0
    %p211 = por %p209, %p210
    %p212 = scmp.ne.s32.totalorder %s200, %s201
    %p213 = scmp.eq.s32.totalorder %s23, 1
    %p214 = por %p212, %p213
    %p216 = scmp.ne.s32.totalorder %s201, %s215
    %p217 = scmp.eq.s32.totalorder %s23, 0
    %p218 = por %p216, %p217
    %s220 = sadd.s32 %s219, 1
    %p223 = scmp.eq.s32.totalorder %s17, 1
    %p224 = scmp.ne.s32.totalorder %s219, %s221
    %p225 = scmp.eq.s32.totalorder %s17, 0
    %p226 = por %p224, %p225
    %p227 = scmp.ne.s32.totalorder %s219, %s221
    %p228 = scmp.eq.s32.totalorder %s22, 1
    %p229 = por %p227, %p228
    %p230 = scmp.ne.s32.totalorder %s221, %s222
    %p231 = scmp.eq.s32.totalorder %s22, 0
    %p232 = por %p230, %p231
    %p233 = scmp.ne.s32.totalorder %s221, %s222
    %p234 = scmp.eq.s32.totalorder %s23, 1
    %p235 = por %p233, %p234
    %p237 = scmp.ne.s32.totalorder %s222, %s236
    %p238 = scmp.eq.s32.totalorder %s23, 0
    %p239 = por %p237, %p238
    %s241 = sadd.s32 %s240, 1
    %p244 = scmp.eq.s32.totalorder %s17, 1
    %p245 = scmp.ne.s32.totalorder %s240, %s242
    %p246 = scmp.eq.s32.totalorder %s17, 0
    %p247 = por %p245, %p246
    %p248 = scmp.ne.s32.totalorder %s240, %s242
    %p249 = scmp.eq.s32.totalorder %s22, 1
    %p250 = por %p248, %p249
    %p251 = scmp.ne.s32.totalorder %s242, %s243
    %p252 = scmp.eq.s32.totalorder %s22, 0
    %p253 = por %p251, %p252
    %p254 = scmp.ne.s32.totalorder %s242, %s243
    %p255 = scmp.eq.s32.totalorder %s23, 1
    %p256 = por %p254, %p255
    %p258 = scmp.ne.s32.totalorder %s243, %s257
    %p259 = scmp.eq.s32.totalorder %s23, 0
    %p260 = por %p258, %p259
    %p261 = scmp.le.s32.totalorder 1, %s17
    %p262 = scmp.lt.s32.totalorder %s17, 3
    %p263 = pnand %p261, %p262
    %p264 = pneg %p263
    // Predicated region
    $region9: #{_forward.1} parent=5 // pred_check
      _
    $region10: #{_forward.1} parent=5 // pred_check_branch
      %266 = sbr.rel (%p263) target = $region12
    $region11: #{_forward.1} parent=5 // pred_region
      %s267 = ssub.s32 %s17, 1
      // Predicated region
      $region13: #{_forward.1} parent=11 // pred_check
        %p268 = pneg %p64
      $region14: #{_forward.1} parent=11 // pred_check_branch
        %270 = sbr.rel (%p268) target = $region16
      $region15: #{_forward.1} parent=11 // pred_region
        _
      $region16: #{_forward.1} parent=11 // pred_fallthru
        _
      // Predicated region
      $region17: #{_forward.1} parent=11 // pred_check
        %p271 = pneg %p85
      $region18: #{_forward.1} parent=11 // pred_check_branch
        %273 = sbr.rel (%p271) target = $region20
      $region19: #{_forward.1} parent=11 // pred_region
        _
      $region20: #{_forward.1} parent=11 // pred_fallthru
        _
      // Predicated region
      $region21: #{_forward.1} parent=11 // pred_check
        %p274 = pneg %p106
      $region22: #{_forward.1} parent=11 // pred_check_branch
        %276 = sbr.rel (%p274) target = $region24
      $region23: #{_forward.1} parent=11 // pred_region
        _
      $region24: #{_forward.1} parent=11 // pred_fallthru
        _
      // Predicated region
      $region25: #{_forward.1} parent=11 // pred_check
        %p277 = pneg %p127
      $region26: #{_forward.1} parent=11 // pred_check_branch
        %279 = sbr.rel (%p277) target = $region28
      $region27: #{_forward.1} parent=11 // pred_region
        _
      $region28: #{_forward.1} parent=11 // pred_fallthru
        _
      // Predicated region
      $region29: #{_forward.1} parent=11 // pred_check
        %p280 = pneg %p148
      $region30: #{_forward.1} parent=11 // pred_check_branch
        %282 = sbr.rel (%p280) target = $region32
      $region31: #{_forward.1} parent=11 // pred_region
        _
      $region32: #{_forward.1} parent=11 // pred_fallthru
        _
      // Predicated region
      $region33: #{_forward.1} parent=11 // pred_check
        %p283 = pneg %p169
      $region34: #{_forward.1} parent=11 // pred_check_branch
        %285 = sbr.rel (%p283) target = $region36
      $region35: #{_forward.1} parent=11 // pred_region
        _
      $region36: #{_forward.1} parent=11 // pred_fallthru
        _
      // Predicated region
      $region37: #{_forward.1} parent=11 // pred_check
        %p286 = pneg %p190
      $region38: #{_forward.1} parent=11 // pred_check_branch
        %288 = sbr.rel (%p286) target = $region40
      $region39: #{_forward.1} parent=11 // pred_region
        _
      $region40: #{_forward.1} parent=11 // pred_fallthru
        _
      // Predicated region
      $region41: #{_forward.1} parent=11 // pred_check
        %p289 = pneg %p211
      $region42: #{_forward.1} parent=11 // pred_check_branch
        %291 = sbr.rel (%p289) target = $region44
      $region43: #{_forward.1} parent=11 // pred_region
        _
      $region44: #{_forward.1} parent=11 // pred_fallthru
        _
    $region12: #{_forward.1} parent=5 // pred_fallthru
      _
    %p292 = scmp.lt.s32.totalorder %s17, 2
    // Predicated region
    $region45: #{_forward.1} parent=5 // pred_check
      %p293 = pneg %p292
    $region46: #{_forward.1} parent=5 // pred_check_branch
      %295 = sbr.rel (%p293) target = $region48
    $region47: #{_forward.1} parent=5 // pred_region
      // Predicated region
      $region49: #{_forward.1} parent=47 // pred_check
        %p296 = pneg %p37
      $region50: #{_forward.1} parent=47 // pred_check_branch
        %298 = sbr.rel (%p296) target = $region52
      $region51: #{_forward.1} parent=47 // pred_region
        %p299 = scmp.lt.s32.totalorder %s17, 1
        %s300 = scalar_select %p299, %s17, 1
        %s301 = smul.addr %s300, 10
        %s302 = smul.addr %s301, 8
        %s303 = scalar_lea.vmem %s0, %s302
      $region52: #{_forward.1} parent=47 // pred_fallthru
        _
    $region48: #{_forward.1} parent=5 // pred_fallthru
      _
    %p304 = scmp.le.s32.totalorder 1, %s17
    %p305 = scmp.lt.s32.totalorder %s17, 3
    %p306 = pnand %p304, %p305
    %p307 = pneg %p306
    // Predicated region
    $region53: #{_forward.1} parent=5 // pred_check
      _
    $region54: #{_forward.1} parent=5 // pred_check_branch
      %309 = sbr.rel (%p306) target = $region56
    $region55: #{_forward.1} parent=5 // pred_region
      %s310 = ssub.s32 %s17, 1
      %p311 = scmp.lt.s32.totalorder %s22, 1
      %s312 = scalar_select %p311, %s22, 1
      %s313 = smul.addr %s312, 10
      %s314 = smul.addr %s313, 8
      %s315 = scalar_lea.vmem %s0, %s314
      %p316 = pneg %p43
      %p317 = pneg %p40
      %p318 = pneg %p64
      %p319 = pneg %p61
      %p320 = pneg %p85
      %p321 = pneg %p82
      %p322 = pneg %p106
      %p323 = pneg %p103
      %p324 = pneg %p127
      %p325 = pneg %p124
      %p326 = pneg %p148
      %p327 = pneg %p145
      %p328 = pneg %p169
      %p329 = pneg %p166
      %p330 = pneg %p190
      %p331 = pneg %p187
      %p332 = pneg %p211
      %p333 = pneg %p208
      %p334 = pneg %p232
      %p335 = pneg %p229
      %p336 = pneg %p253
      %p337 = pneg %p250
      %p338 = scmp.lt.s32.totalorder %s22, 1
      %s339 = scalar_select %p338, %s22, 1
      %s340 = smul.addr %s339, 10
      %s341 = smul.addr %s340, 8
      %s342 = scalar_lea.vmem %s0, %s341
      %v343 = vld [vmem:[%s1] sm:$0xff]
      %v344 = vld [vmem:[%s342] sm:$0xff]
      %v345 = vld [vmem:[%s342 + $0x8] sm:$0xff]
      %v346 = vld [vmem:[%s342 + $0x10] sm:$0xff]
      %v347 = vld [vmem:[%s342 + $0x18] sm:$0xff]
      %v348 = vld [vmem:[%s342 + $0x20] sm:$0xff]
      %v349 = vld [vmem:[%s342 + $0x28] sm:$0xff]
      %v350 = vld [vmem:[%s342 + $0x30] sm:$0xff]
      %v351 = vld [vmem:[%s342 + $0x38] sm:$0xff]
      %v352 = vld [vmem:[%s342 + $0x40] sm:$0xf]
      %v353 = vld [vmem:[%s342 + $0x48] sm:$0xf]
      %v354 = vld [vmem:[%s2] sm:$0xff]
      %356 = vset.pattern.permute.xlu0 0
      %357 = vperm.xlu0 %356, %v354
      %v358 = vpop.permute.xlu0 %357
      %vm360 = vcmask 293888
      %v362 = vsel %vm360, %v343, 0
      %vm364 = vcmask 1043456
      %v366 = vsel %vm364, %v352, 0
      %v369 = vsel %vm364, %v353, 0
      %371 = vmatprep.subr.mxu0 %v345
      %372 = vmatpush1.msra.mxu0 %v344
      %373 = vmatprep.subr.mxu0 %v347
      %374 = vmatpush1.msra.mxu0 %v346
      %375 = vmatprep.subr.mxu0 %v349
      %376 = vmatpush1.msra.mxu0 %v348
      %377 = vmatprep.subr.mxu0 %v351
      %378 = vmatpush1.msra.mxu0 %v350
      %379 = vmatprep.subr.mxu0 %v369
      %380 = vmatpush1.msra.mxu0 %v366
      %381 = vmatprep.subr.mxu0 0.0
      %382 = vmatpush1.msra.mxu0 0.0
      %383 = vmatprep.subr.mxu0 0.0
      %384 = vmatpush1.msra.mxu0 0.0
      %385 = vmatprep.subr.mxu0 0.0
      %386 = vmatpush1.msra.mxu0 0.0
      %387 = vmatprep.subr.mxu0 0.0
      %388 = vmatpush1.msra.mxu0 0.0
      %389 = vmatprep.subr.mxu0 0.0
      %390 = vmatpush1.msra.mxu0 0.0
      %391 = vmatprep.subr.mxu0 0.0
      %392 = vmatpush1.msra.mxu0 0.0
      %393 = vmatprep.subr.mxu0 0.0
      %394 = vmatpush1.msra.mxu0 0.0
      %395 = vmatprep.subr.mxu0 0.0
      %396 = vmatpush1.msra.mxu0 0.0
      %397 = vmatprep.subr.mxu0 0.0
      %398 = vmatpush1.msra.mxu0 0.0
      %399 = vmatprep.subr.mxu0 0.0
      %400 = vmatpush1.msra.mxu0 0.0
      %401 = vmatprep.subr.mxu0 0.0
      %402 = vmatpush1.msra.mxu0 0.0
      %403 = vmatprep.subr.mxu0 0.0
      %404 = vmatpush1.msra.mxu0 0.0
      %405 = vmatprep.subr.mxu0 0.0
      %406 = vmatpush1.msra.mxu0 0.0
      %407 = vmatprep.subr.mxu0 0.0
      %408 = vmatpush1.msra.mxu0 0.0
      %409 = vmatprep.subr.mxu0 0.0
      %410 = vmatpush1.msra.mxu0 0.0
      %411 = vmatprep.subr.mxu0 0.0
      %412 = vmatpush1.msra.mxu0 0.0
      %413 = vmatprep.subr.mxu0 0.0
      %414 = vmatpush1.msra.mxu0 0.0
      %415 = vmatprep.subr.mxu0 0.0
      %416 = vmatpush1.msra.mxu0 0.0
      %417 = vmatprep.subr.mxu0 0.0
      %418 = vmatpush1.msra.mxu0 0.0
      %419 = vmatprep.subr.mxu0 0.0
      %420 = vmatpush1.msra.mxu0 0.0
      %421 = vmatprep.subr.mxu0 0.0
      %422 = vmatpush1.msra.mxu0 0.0
      %423 = vmatprep.subr.mxu0 0.0
      %424 = vmatpush1.msra.mxu0 0.0
      %425 = vmatprep.subr.mxu0 0.0
      %426 = vmatpush1.msra.mxu0 0.0
      %427 = vmatprep.subr.mxu0 0.0
      %428 = vmatpush1.msra.mxu0 0.0
      %429 = vmatprep.subr.mxu0 0.0
      %430 = vmatpush1.msra.mxu0 0.0
      %431 = vmatprep.subr.mxu0 0.0
      %432 = vmatpush1.msra.mxu0 0.0
      %433 = vmatprep.subr.mxu0 0.0
      %434 = vmatpush1.msra.mxu0 0.0
      %435 = vmatprep.mubr.f32.mxu0 0.0
      %436 = vmatmul.mubr.f32.gmra.mrb[0].mxu0 %v362
      %v437 = vpop.f32.mrb[0].mxu0
      %v438 = vadd.f32 %v358, %v437
      %v439 = vpop.f32.mrb[0].mxu0
      %v440 = vadd.f32 %v358, %v439
      %441 = vdwg.mxu0
      %v442 = vmax.f32 %v438, 0.0
      %v443 = vmax.f32 %v440, 0.0
      %v444 = vadd.f32 %v442, %v443
      %445 = vadd.xlane.f32.xlu0 %v444
      %v446 = vpop.xlane.xlu0 %445
      %v447 = vmul.f32 %v446, 0.00390625
      %p448 = scmp.eq.s32.totalorder %s22, 0
      // Predicated region
      $region57: #{_forward.1} parent=55 // pred_check
        %p449 = pneg %p448
      $region58: #{_forward.1} parent=55 // pred_check_branch
        %451 = sbr.rel (%p449) target = $region60
      $region59: #{_forward.1} parent=55 // pred_region
        %vm452 = vcmask 15360
        %453 = vst.msk [vmem:[%s10] sm:$0xff] %vm452, 0.0
      $region60: #{_forward.1} parent=55 // pred_fallthru
        _
      %v454 = vlaneseq
      %v455 = vand.u32 %v454, 127
      %v456 = vstv %s22
      %vm457 = vcmp.eq.s32.totalorder %v455, %v456
      %v458 = vld [vmem:[%s10] sm:$0xff]
      %v459 = vsel %vm457, %v447, %v458
      %vm460 = vcmask 15360
      %461 = vst.msk [vmem:[%s10] sm:$0xff] %vm460, %v459
      %p462 = scmp.eq.s32.totalorder %s22, 1
      // Predicated region
      $region61: #{_forward.1} parent=55 // pred_check
        %p463 = pneg %p462
      $region62: #{_forward.1} parent=55 // pred_check_branch
        %465 = sbr.rel (%p463) target = $region64
      $region63: #{_forward.1} parent=55 // pred_region
        %v466 = vld [vmem:[%s10] sm:$0xff]
        %v467 = vld [vmem:[%s3] sm:$0xff]
        %v468 = vld [vmem:[%s3 + $0x8] sm:$0xff]
        %v469 = vld [vmem:[%s3 + $0x10] sm:$0xff]
        %v470 = vld [vmem:[%s3 + $0x18] sm:$0xff]
        %v471 = vld [vmem:[%s4] sm:$0xff]
        %v472 = vld [vmem:[%s4 + $0x8] sm:$0xff]
        %v473 = vld [vmem:[%s4 + $0x10] sm:$0xff]
        %v474 = vld [vmem:[%s4 + $0x18] sm:$0xff]
        %476 = vset.pattern.permute.xlu0 0
        %477 = vperm.xlu0 %476, %v471
        %v478 = vpop.permute.xlu0 %477
        %481 = vset.pattern.permute.xlu0 0
        %482 = vperm.xlu0 %481, %v472
        %v483 = vpop.permute.xlu0 %482
        %486 = vset.pattern.permute.xlu0 0
        %487 = vperm.xlu0 %486, %v473
        %v488 = vpop.permute.xlu0 %487
        %491 = vset.pattern.permute.xlu0 0
        %492 = vperm.xlu0 %491, %v474
        %v493 = vpop.permute.xlu0 %492
        %vm495 = vcmask 64512
        %v497 = vsel %vm495, %v467, 0
        %v500 = vsel %vm495, %v468, 0
        %v503 = vsel %vm495, %v469, 0
        %v506 = vsel %vm495, %v470, 0
        %508 = vmatprep.subr.mxu0 0.0
        %509 = vmatpush1.msra.mxu0 %v466
        %510 = vmatprep.subr.mxu0 0.0
        %511 = vmatpush1.msra.mxu0 0.0
        %512 = vmatprep.subr.mxu0 0.0
        %513 = vmatpush1.msra.mxu0 0.0
        %514 = vmatprep.subr.mxu0 0.0
        %515 = vmatpush1.msra.mxu0 0.0
        %516 = vmatprep.subr.mxu0 0.0
        %517 = vmatpush1.msra.mxu0 0.0
        %518 = vmatprep.subr.mxu0 0.0
        %519 = vmatpush1.msra.mxu0 0.0
        %520 = vmatprep.subr.mxu0 0.0
        %521 = vmatpush1.msra.mxu0 0.0
        %522 = vmatprep.subr.mxu0 0.0
        %523 = vmatpush1.msra.mxu0 0.0
        %524 = vmatprep.subr.mxu0 0.0
        %525 = vmatpush1.msra.mxu0 0.0
        %526 = vmatprep.subr.mxu0 0.0
        %527 = vmatpush1.msra.mxu0 0.0
        %528 = vmatprep.subr.mxu0 0.0
        %529 = vmatpush1.msra.mxu0 0.0
        %530 = vmatprep.subr.mxu0 0.0
        %531 = vmatpush1.msra.mxu0 0.0
        %532 = vmatprep.subr.mxu0 0.0
        %533 = vmatpush1.msra.mxu0 0.0
        %534 = vmatprep.subr.mxu0 0.0
        %535 = vmatpush1.msra.mxu0 0.0
        %536 = vmatprep.subr.mxu0 0.0
        %537 = vmatpush1.msra.mxu0 0.0
        %538 = vmatprep.subr.mxu0 0.0
        %539 = vmatpush1.msra.mxu0 0.0
        %540 = vmatprep.subr.mxu0 0.0
        %541 = vmatpush1.msra.mxu0 0.0
        %542 = vmatprep.subr.mxu0 0.0
        %543 = vmatpush1.msra.mxu0 0.0
        %544 = vmatprep.subr.mxu0 0.0
        %545 = vmatpush1.msra.mxu0 0.0
        %546 = vmatprep.subr.mxu0 0.0
        %547 = vmatpush1.msra.mxu0 0.0
        %548 = vmatprep.subr.mxu0 0.0
        %549 = vmatpush1.msra.mxu0 0.0
        %550 = vmatprep.subr.mxu0 0.0
        %551 = vmatpush1.msra.mxu0 0.0
        %552 = vmatprep.subr.mxu0 0.0
        %553 = vmatpush1.msra.mxu0 0.0
        %554 = vmatprep.subr.mxu0 0.0
        %555 = vmatpush1.msra.mxu0 0.0
        %556 = vmatprep.subr.mxu0 0.0
        %557 = vmatpush1.msra.mxu0 0.0
        %558 = vmatprep.subr.mxu0 0.0
        %559 = vmatpush1.msra.mxu0 0.0
        %560 = vmatprep.subr.mxu0 0.0
        %561 = vmatpush1.msra.mxu0 0.0
        %562 = vmatprep.subr.mxu0 0.0
        %563 = vmatpush1.msra.mxu0 0.0
        %564 = vmatprep.subr.mxu0 0.0
        %565 = vmatpush1.msra.mxu0 0.0
        %566 = vmatprep.subr.mxu0 0.0
        %567 = vmatpush1.msra.mxu0 0.0
        %568 = vmatprep.subr.mxu0 0.0
        %569 = vmatpush1.msra.mxu0 0.0
        %570 = vmatprep.subr.mxu0 0.0
        %571 = vmatpush1.msra.mxu0 0.0
        %572 = vmatprep.mubr.f32.mxu0 0.0
        %573 = vmatmul.mubr.f32.gmra.mrb[0].mxu0 %v497
        %v574 = vpop.f32.mrb[0].mxu0
        %v575 = vadd.f32 %v478, %v574
        %v576 = vpop.f32.mrb[0].mxu0
        %577 = vmatprep.mubr.f32.mxu0 0.0
        %578 = vmatmul.mubr.f32.gmra.mrb[0].mxu0 %v500
        %v579 = vpop.f32.mrb[0].mxu0
        %v580 = vadd.f32 %v483, %v579
        %v581 = vpop.f32.mrb[0].mxu0
        %582 = vmatprep.mubr.f32.mxu0 0.0
        %583 = vmatmul.mubr.f32.gmra.mrb[0].mxu0 %v503
        %v584 = vpop.f32.mrb[0].mxu0
        %v585 = vadd.f32 %v488, %v584
        %v586 = vpop.f32.mrb[0].mxu0
        %587 = vmatprep.mubr.f32.mxu0 0.0
        %588 = vmatmul.mubr.f32.gmra.mrb[0].mxu0 %v506
        %v589 = vpop.f32.mrb[0].mxu0
        %v590 = vadd.f32 %v493, %v589
        %v591 = vpop.f32.mrb[0].mxu0
        %592 = vdwg.mxu0
        %v593 = vsel %vm460, %v575, 0.0
        %594 = vadd.xlane.f32.xlu0 %v593
        %v595 = vpop.xlane.xlu0 %594
        %v596 = vsel %vm460, %v580, 0.0
        %597 = vadd.xlane.f32.xlu0 %v596
        %v598 = vpop.xlane.xlu0 %597
        %v599 = vsel %vm460, %v585, 0.0
        %600 = vadd.xlane.f32.xlu0 %v599
        %v601 = vpop.xlane.xlu0 %600
        %v602 = vsel %vm460, %v590, 0.0
        %603 = vadd.xlane.f32.xlu0 %v602
        %v604 = vpop.xlane.xlu0 %603
        %v605 = vrcp.pop 2.0
        %v606 = vmul.f32 %v595, %v605
        %v607 = vmul.f32 %v598, %v605
        %v608 = vmul.f32 %v601, %v605
        %v609 = vmul.f32 %v604, %v605
        %v610 = vsub.f32 %v575, %v606
        %v611 = vsub.f32 %v580, %v607
        %v612 = vsub.f32 %v585, %v608
        %v613 = vsub.f32 %v590, %v609
        %v614 = vmul.f32 %v610, %v610
        %v615 = vmul.f32 %v611, %v611
        %v616 = vmul.f32 %v612, %v612
        %v617 = vmul.f32 %v613, %v613
        %v618 = vsel %vm460, %v614, 0.0
        %619 = vadd.xlane.f32.xlu0 %v618
        %v620 = vpop.xlane.xlu0 %619
        %v621 = vsel %vm460, %v615, 0.0
        %622 = vadd.xlane.f32.xlu0 %v621
        %v623 = vpop.xlane.xlu0 %622
        %v624 = vsel %vm460, %v616, 0.0
        %625 = vadd.xlane.f32.xlu0 %v624
        %v626 = vpop.xlane.xlu0 %625
        %v627 = vsel %vm460, %v617, 0.0
        %628 = vadd.xlane.f32.xlu0 %v627
        %v629 = vpop.xlane.xlu0 %628
        %v630 = vmul.f32 %v620, %v605
        %v631 = vmul.f32 %v623, %v605
        %v632 = vmul.f32 %v626, %v605
        %v633 = vmul.f32 %v629, %v605
        %v634 = vadd.f32 %v630, 1e-05
        %v635 = vadd.f32 %v631, 1e-05
        %v636 = vadd.f32 %v632, 1e-05
        %v637 = vadd.f32 %v633, 1e-05
        %v638 = vrsqrt.pop %v634
        %v639 = vrsqrt.pop %v635
        %v640 = vrsqrt.pop %v636
        %v641 = vrsqrt.pop %v637
        %v642 = vmul.f32 %v610, %v638
        %v643 = vmul.f32 %v611, %v639
        %v644 = vmul.f32 %v612, %v640
        %v645 = vmul.f32 %v613, %v641
        %v646 = vld [vmem:[%s5] sm:$0xff]
        %v647 = vld [vmem:[%s5 + $0x8] sm:$0xff]
        %v648 = vld [vmem:[%s5 + $0x10] sm:$0xff]
        %v649 = vld [vmem:[%s5 + $0x18] sm:$0xff]
        %651 = vset.pattern.permute.xlu0 0
        %652 = vperm.xlu0 %651, %v646
        %v653 = vpop.permute.xlu0 %652
        %656 = vset.pattern.permute.xlu0 0
        %657 = vperm.xlu0 %656, %v647
        %v658 = vpop.permute.xlu0 %657
        %661 = vset.pattern.permute.xlu0 0
        %662 = vperm.xlu0 %661, %v648
        %v663 = vpop.permute.xlu0 %662
        %666 = vset.pattern.permute.xlu0 0
        %667 = vperm.xlu0 %666, %v649
        %v668 = vpop.permute.xlu0 %667
        %v670 = vmul.f32 %v642, %v653
        %v671 = vmul.f32 %v643, %v658
        %v672 = vmul.f32 %v644, %v663
        %v673 = vmul.f32 %v645, %v668
        %v674 = vld [vmem:[%s6] sm:$0xff]
        %v675 = vld [vmem:[%s6 + $0x8] sm:$0xff]
        %v676 = vld [vmem:[%s6 + $0x10] sm:$0xff]
        %v677 = vld [vmem:[%s6 + $0x18] sm:$0xff]
        %679 = vset.pattern.permute.xlu0 0
        %680 = vperm.xlu0 %679, %v674
        %v681 = vpop.permute.xlu0 %680
        %684 = vset.pattern.permute.xlu0 0
        %685 = vperm.xlu0 %684, %v675
        %v686 = vpop.permute.xlu0 %685
        %689 = vset.pattern.permute.xlu0 0
        %690 = vperm.xlu0 %689, %v676
        %v691 = vpop.permute.xlu0 %690
        %694 = vset.pattern.permute.xlu0 0
        %695 = vperm.xlu0 %694, %v677
        %v696 = vpop.permute.xlu0 %695
        %v698 = vadd.f32 %v670, %v681
        %v699 = vadd.f32 %v671, %v686
        %v700 = vadd.f32 %v672, %v691
        %v701 = vadd.f32 %v673, %v696
        %v702 = vmax.f32 %v698, 0.0
        %v703 = vmax.f32 %v699, 0.0
        %v704 = vmax.f32 %v700, 0.0
        %v705 = vmax.f32 %v701, 0.0
        %v706 = vld [vmem:[%s7] sm:$0xff]
        %v707 = vld [vmem:[%s7 + $0x8] sm:$0xff]
        %v708 = vld [vmem:[%s8] sm:$0xff]
        %v709 = vld [vmem:[%s8 + $0x8] sm:$0xff]
        %711 = vset.pattern.permute.xlu0 0
        %712 = vperm.xlu0 %711, %v708
        %v713 = vpop.permute.xlu0 %712
        %716 = vset.pattern.permute.xlu0 0
        %717 = vperm.xlu0 %716, %v709
        %v718 = vpop.permute.xlu0 %717
        %vm720 = vcmask 261120
        %v722 = vsel %vm720, %v706, 0
        %v725 = vsel %vm720, %v707, 0
        %727 = vmatprep.subr.mxu0 0.0
        %728 = vmatpush1.msra.mxu0 %v702
        %729 = vmatprep.subr.mxu0 0.0
        %730 = vmatpush1.msra.mxu0 %v703
        %731 = vmatprep.subr.mxu0 0.0
        %732 = vmatpush1.msra.mxu0 %v704
        %733 = vmatprep.subr.mxu0 0.0
        %734 = vmatpush1.msra.mxu0 %v705
        %735 = vmatprep.subr.mxu0 0.0
        %736 = vmatpush1.msra.mxu0 0.0
        %737 = vmatprep.subr.mxu0 0.0
        %738 = vmatpush1.msra.mxu0 0.0
        %739 = vmatprep.subr.mxu0 0.0
        %740 = vmatpush1.msra.mxu0 0.0
        %741 = vmatprep.subr.mxu0 0.0
        %742 = vmatpush1.msra.mxu0 0.0
        %743 = vmatprep.subr.mxu0 0.0
        %744 = vmatpush1.msra.mxu0 0.0
        %745 = vmatprep.subr.mxu0 0.0
        %746 = vmatpush1.msra.mxu0 0.0
        %747 = vmatprep.subr.mxu0 0.0
        %748 = vmatpush1.msra.mxu0 0.0
        %749 = vmatprep.subr.mxu0 0.0
        %750 = vmatpush1.msra.mxu0 0.0
        %751 = vmatprep.subr.mxu0 0.0
        %752 = vmatpush1.msra.mxu0 0.0
        %753 = vmatprep.subr.mxu0 0.0
        %754 = vmatpush1.msra.mxu0 0.0
        %755 = vmatprep.subr.mxu0 0.0
        %756 = vmatpush1.msra.mxu0 0.0
        %757 = vmatprep.subr.mxu0 0.0
        %758 = vmatpush1.msra.mxu0 0.0
        %759 = vmatprep.subr.mxu0 0.0
        %760 = vmatpush1.msra.mxu0 0.0
        %761 = vmatprep.subr.mxu0 0.0
        %762 = vmatpush1.msra.mxu0 0.0
        %763 = vmatprep.subr.mxu0 0.0
        %764 = vmatpush1.msra.mxu0 0.0
        %765 = vmatprep.subr.mxu0 0.0
        %766 = vmatpush1.msra.mxu0 0.0
        %767 = vmatprep.subr.mxu0 0.0
        %768 = vmatpush1.msra.mxu0 0.0
        %769 = vmatprep.subr.mxu0 0.0
        %770 = vmatpush1.msra.mxu0 0.0
        %771 = vmatprep.subr.mxu0 0.0
        %772 = vmatpush1.msra.mxu0 0.0
        %773 = vmatprep.subr.mxu0 0.0
        %774 = vmatpush1.msra.mxu0 0.0
        %775 = vmatprep.subr.mxu0 0.0
        %776 = vmatpush1.msra.mxu0 0.0
        %777 = vmatprep.subr.mxu0 0.0
        %778 = vmatpush1.msra.mxu0 0.0
        %779 = vmatprep.subr.mxu0 0.0
        %780 = vmatpush1.msra.mxu0 0.0
        %781 = vmatprep.subr.mxu0 0.0
        %782 = vmatpush1.msra.mxu0 0.0
        %783 = vmatprep.subr.mxu0 0.0
        %784 = vmatpush1.msra.mxu0 0.0
        %785 = vmatprep.subr.mxu0 0.0
        %786 = vmatpush1.msra.mxu0 0.0
        %787 = vmatprep.subr.mxu0 0.0
        %788 = vmatpush1.msra.mxu0 0.0
        %789 = vmatprep.subr.mxu0 0.0
        %790 = vmatpush1.msra.mxu0 0.0
        %791 = vmatprep.mubr.f32.mxu0 0.0
        %792 = vmatmul.mubr.f32.gmra.mrb[0].mxu0 %v722
        %v793 = vpop.f32.mrb[0].mxu0
        %v794 = vadd.f32 %v713, %v793
        %v795 = vpop.f32.mrb[0].mxu0
        %796 = vmatprep.mubr.f32.mxu0 0.0
        %797 = vmatmul.mubr.f32.gmra.mrb[0].mxu0 %v725
        %v798 = vpop.f32.mrb[0].mxu0
        %v799 = vadd.f32 %v718, %v798
        %v800 = vpop.f32.mrb[0].mxu0
        %801 = vdwg.mxu0
        %802 = vst.msk [vmem:[%s9] sm:$0xff] %vm460, %v794
        %803 = vst.msk [vmem:[%s9 + $0x8] sm:$0xff] %vm460, %v799
      $region64: #{_forward.1} parent=55 // pred_fallthru
        _
      // Predicated region
      $region65: #{_forward.1} parent=55 // pred_check
        %p804 = pneg %p229
      $region66: #{_forward.1} parent=55 // pred_check_branch
        %806 = sbr.rel (%p804) target = $region68
      $region67: #{_forward.1} parent=55 // pred_region
        _
      $region68: #{_forward.1} parent=55 // pred_fallthru
        _
      // Predicated region
      $region69: #{_forward.1} parent=55 // pred_check
        %p807 = pneg %p250
      $region70: #{_forward.1} parent=55 // pred_check_branch
        %809 = sbr.rel (%p807) target = $region72
      $region71: #{_forward.1} parent=55 // pred_region
        _
      $region72: #{_forward.1} parent=55 // pred_fallthru
        _
      // Predicated region
      $region73: #{_forward.1} parent=55 // pred_check
        %p810 = pneg %p229
      $region74: #{_forward.1} parent=55 // pred_check_branch
        %812 = sbr.rel (%p810) target = $region76
      $region75: #{_forward.1} parent=55 // pred_region
        _
      $region76: #{_forward.1} parent=55 // pred_fallthru
        _
      // Predicated region
      $region77: #{_forward.1} parent=55 // pred_check
        %p813 = pneg %p250
      $region78: #{_forward.1} parent=55 // pred_check_branch
        %815 = sbr.rel (%p813) target = $region80
      $region79: #{_forward.1} parent=55 // pred_region
        _
      $region80: #{_forward.1} parent=55 // pred_fallthru
        _
    $region56: #{_forward.1} parent=5 // pred_fallthru
      _
    %p816 = scmp.le.s32.totalorder 2, %s17
    // Predicated region
    $region81: #{_forward.1} parent=5 // pred_check
      %p817 = pneg %p816
    $region82: #{_forward.1} parent=5 // pred_check_branch
      %819 = sbr.rel (%p817) target = $region84
    $region83: #{_forward.1} parent=5 // pred_region
      %s820 = ssub.s32 %s17, 2
    $region84: #{_forward.1} parent=5 // pred_fallthru
      _
  $region6: #{_forward.1} parent=0 // loop_footer
    %s21 = sadd.s32 1, %s17
  $region7: #{_forward.1} parent=0 // loop_footer_branch
    %16 = sbr.rel target = $region3
  $region8: #{_forward.1} parent=0 // loop_exit
    _

</llo_original>
